<compile_context>
chip_gen: v5e
topology: v5e:2x2
jax: 0.10.0
libtpu: 0.0.40
codegen_flags: <defaults>
</compile_context>

<pallas_src>
import functools

import jax
import jax.numpy as jnp
from jax.experimental import pallas as pl
from jax.experimental.pallas import tpu as pltpu


def _round_up(x, m):
    return (x + m - 1) // m * m


def _choose_tm(M, tm_max, min_steps=1):
    """Row tile: multiple of 8, <= tm_max, minimizing padded rows, preferring
    larger tiles on ties; optionally forces >= min_steps grid steps so
    multi-TensorCore chips (v7x) can shard the row axis on small M."""
    M8 = _round_up(M, 8)
    cap = max(8, min(_round_up(tm_max, 8), M8))
    lo = 8 if min_steps > 1 else min(128, cap)
    cands = list(range(lo, cap + 1, 8))

    def key(tm):
        return (_round_up(M8, tm), -tm)          # least padding, then biggest tile

    ok = [tm for tm in cands if _round_up(M8, tm) // tm >= min_steps]
    return min(ok or cands, key=key)


def _choose_th(H_pad, th_max=512):
    """H chunk: largest 128-multiple divisor of H_pad that is <= th_max."""
    if H_pad <= th_max:
        return H_pad
    th = 128
    for cand in range(128, th_max + 1, 128):
        if H_pad % cand == 0:
            th = cand
    return th


def ffn_kernel(x_ref, w1_ref, b1_ref, w2_ref, b2_ref, o_ref, acc_ref, *, th, n_chunks):
    # x_ref:  (TM, E_pad) compute dtype   w1_ref: (E_pad, H_pad) compute dtype
    # b1_ref: (1, H_pad) f32              w2_ref: (H_pad, E_pad) compute dtype
    # b2_ref: (1, E_pad) f32              o_ref:  (TM, E_pad) out dtype
    # acc_ref: (TM, E_pad) f32 VMEM scratch accumulator
    x = x_ref[...]                                   # already in compute dtype

    def fc_chunk(k):                                 # k is a static Python int
        h0 = k * th
        h = jnp.dot(x, w1_ref[:, h0:h0 + th],
                    preferred_element_type=jnp.float32)
        h = jnp.maximum(h + b1_ref[:, h0:h0 + th], 0.0)     # bias + ReLU in f32
        # dropout: identity (eval / inference mode)
        return jnp.dot(h.astype(w2_ref.dtype), w2_ref[h0:h0 + th, :],
                       preferred_element_type=jnp.float32)

    acc_ref[...] = fc_chunk(0)
    for k in range(1, n_chunks):                     # static, short (H_pad // th)
        acc_ref[...] += fc_chunk(k)
    o_ref[...] = (acc_ref[...] + b2_ref[...]).astype(o_ref.dtype)


def prepare_ffn_params(w1, b1, w2, b2, compute_dtype=jnp.bfloat16):
    """One-time transform of torch-layout Linear params.

    w1: (H, E), b1: (H,), w2: (E, H), b2: (E,)  (torch nn.Linear layout).
    Transposes, pads last dims to multiples of 128, and casts weights to the
    MXU compute dtype ONCE, so no per-call transpose/cast is paid.
    """
    H, E = w1.shape
    E_pad, H_pad = _round_up(E, 128), _round_up(H, 128)
    w1_t = jnp.transpose(w1)          # (E, H)
    w2_t = jnp.transpose(w2)          # (H, E)
    if (E_pad, H_pad) != (E, H):
        w1_t = jnp.pad(w1_t, ((0, E_pad - E), (0, H_pad - H)))
        w2_t = jnp.pad(w2_t, ((0, H_pad - H), (0, E_pad - E)))
        b1 = jnp.pad(b1, (0, H_pad - H))
        b2 = jnp.pad(b2, (0, E_pad - E))
    return {
        "w1": w1_t.astype(compute_dtype),
        "b1": b1.astype(jnp.float32).reshape(1, H_pad),
        "w2": w2_t.astype(compute_dtype),
        "b2": b2.astype(jnp.float32).reshape(1, E_pad),
    }


def _ffn_call(x2, w1, b1, w2, b2, *, TM, TH, n_chunks, out_dtype,
              vmem_limit_bytes, single_buffer_weights):
    M_pad, E_pad = x2.shape
    _, H_pad = w1.shape
    grid = (M_pad // TM,)

    resident = {}
    if single_buffer_weights:
        # Constant index_map -> one VMEM buffer suffices; halves resident-weight
        # VMEM vs. the default double-buffering.
        resident = dict(pipeline_mode=pl.Buffered(1))

    kernel = functools.partial(ffn_kernel, th=TH, n_chunks=n_chunks)

    nbytes = lambda a: a.size * a.dtype.itemsize
    cost = pl.CostEstimate(
        flops=2 * M_pad * E_pad * H_pad * 2,
        transcendentals=0,
        bytes_accessed=(nbytes(x2) + nbytes(w1) + nbytes(w2) + nbytes(b1)
                        + nbytes(b2)
                        + M_pad * E_pad * jnp.dtype(out_dtype).itemsize),
    )

    return pl.pallas_call(
        kernel,
        out_shape=jax.ShapeDtypeStruct((M_pad, E_pad), out_dtype),
        grid=grid,
        in_specs=[
            pl.BlockSpec((TM, E_pad), lambda i: (i, 0)),                  # x tile (pipelined)
            pl.BlockSpec((E_pad, H_pad), lambda i: (0, 0), **resident),   # w1 resident
            pl.BlockSpec((1, H_pad), lambda i: (0, 0), **resident),       # b1 resident
            pl.BlockSpec((H_pad, E_pad), lambda i: (0, 0), **resident),   # w2 resident
            pl.BlockSpec((1, E_pad), lambda i: (0, 0), **resident),       # b2 resident
        ],
        out_specs=pl.BlockSpec((TM, E_pad), lambda i: (i, 0)),
        scratch_shapes=[pltpu.VMEM((TM, E_pad), jnp.float32)],            # f32 accumulator
        compiler_params=pltpu.CompilerParams(
            dimension_semantics=("parallel",),
            vmem_limit_bytes=vmem_limit_bytes,
        ),
        cost_estimate=cost,
    )(x2, w1, b1, w2, b2)


def feed_forward(x, params, *, tm=512, th=512, min_grid_steps=1, out_dtype=None,
                 vmem_limit_bytes=48 * 1024 * 1024):
    """x: (B, S, E); params from prepare_ffn_params(). Returns (B, S, E).

    v7x: keep tm<=512 / vmem_limit<=48 MiB; pass min_grid_steps=2 for small-M
    latency-bound calls so both TensorCores get a row tile.
    v6e/v5e: tm=1024 and vmem_limit_bytes ~= 96 MiB are safe (128 MiB VMEM).
    """
    B, S, E = x.shape
    w1, b1, w2, b2 = params["w1"], params["b1"], params["w2"], params["b2"]
    E_pad, H_pad = w1.shape
    compute_dtype = w1.dtype
    out_dtype = x.dtype if out_dtype is None else out_dtype

    M = B * S
    TM = _choose_tm(M, tm, min_grid_steps)
    M_pad = _round_up(M, TM)
    TH = _choose_th(H_pad, th)
    n_chunks = H_pad // TH

    # Cast to compute dtype ONCE in the wrapper (halves streamed x DMA in bf16).
    x2 = x.reshape(M, E).astype(compute_dtype)
    if (M_pad, E_pad) != (M, E):
        x2 = jnp.pad(x2, ((0, M_pad - M), (0, E_pad - E)))

    kwargs = dict(TM=TM, TH=TH, n_chunks=n_chunks, out_dtype=out_dtype,
                  vmem_limit_bytes=vmem_limit_bytes)
    try:
        out = _ffn_call(x2, w1, b1, w2, b2, single_buffer_weights=True, **kwargs)
    except Exception:
        # Some jax builds reject pipeline_mode=pl.Buffered(1); fall back to the
        # default double-buffered weight specs (correct, just more VMEM).
        out = _ffn_call(x2, w1, b1, w2, b2, single_buffer_weights=False, **kwargs)

    return out[:M, :E].reshape(B, S, E)


def init_linear_params(key, out_features, in_features, dtype=jnp.float32):
    """Deterministic init mimicking torch.nn.Linear (U(-1/sqrt(fan_in), 1/sqrt(fan_in)))."""
    kw, kb = jax.random.split(key)
    bound = 1.0 / jnp.sqrt(jnp.array(in_features, dtype))
    w = jax.random.uniform(kw, (out_features, in_features), dtype,
                           minval=-bound, maxval=bound)
    b = jax.random.uniform(kb, (out_features,), dtype,
                           minval=-bound, maxval=bound)
    return w, b


if __name__ == "__main__":
    embed_size = 32
    ff_hidden_dim = 64
    batch, seq = 2, 8

    root = jax.random.PRNGKey(0)
    kx, k1, k2 = jax.random.split(root, 3)

    x = jax.random.normal(kx, (batch, seq, embed_size), jnp.float32)
    w1, b1 = init_linear_params(k1, ff_hidden_dim, embed_size)   # fc1
    w2, b2 = init_linear_params(k2, embed_size, ff_hidden_dim)   # fc2

    # pure f32 reference (torch eval-mode semantics)
    y_ref = jnp.maximum(x @ w1.T + b1, 0.0) @ w2.T + b2

    # 1) f32 compute path: tight check against reference (demo-only; production = bf16).
    params_f32 = prepare_ffn_params(w1, b1, w2, b2, compute_dtype=jnp.float32)
    y_f32 = jax.block_until_ready(feed_forward(x, params_f32))
    assert y_f32.shape == (batch, seq, embed_size)
    assert jnp.allclose(y_f32, y_ref, atol=1e-5, rtol=1e-5)

    # 2) bf16 MXU path (f32 accumulation): production configuration, loose check
    #    (activations are also bf16-quantized, not just weights).
    params_bf16 = prepare_ffn_params(w1, b1, w2, b2, compute_dtype=jnp.bfloat16)
    y_bf16 = jax.block_until_ready(feed_forward(x, params_bf16))
    assert y_bf16.shape == (batch, seq, embed_size)
    assert jnp.allclose(y_bf16, y_ref, atol=5e-2, rtol=5e-2)

    # 3) multi-tile grid path (grid > 1) at a small shape, f32, tight check.
    x_big = jax.random.normal(jax.random.PRNGKey(1), (2, 64, embed_size), jnp.float32)
    y_big = jax.block_until_ready(feed_forward(x_big, params_f32, tm=32))
    y_big_ref = jnp.maximum(x_big @ w1.T + b1, 0.0) @ w2.T + b2
    assert y_big.shape == (2, 64, embed_size)
    assert jnp.allclose(y_big, y_big_ref, atol=1e-5, rtol=1e-5)

    # 4) forced >=2 grid steps (v7x two-TensorCore split path for small M).
    y_split = jax.block_until_ready(feed_forward(x, params_f32, min_grid_steps=2))
    assert y_split.shape == (batch, seq, embed_size)
    assert jnp.allclose(y_split, y_ref, atol=1e-5, rtol=1e-5)

    print("KERNEL_OK")
</pallas_src>

<mosaic_0001>
module attributes {stable_mosaic.version = 11 : i64} {
  func.func @ffn_kernel(%arg0: i32, %arg1: memref<16x128xf32, #tpu.memory_space<vmem>>, %arg2: memref<128x128xf32, #tpu.memory_space<vmem>>, %arg3: memref<1x128xf32, #tpu.memory_space<vmem>>, %arg4: memref<128x128xf32, #tpu.memory_space<vmem>>, %arg5: memref<1x128xf32, #tpu.memory_space<vmem>>, %arg6: memref<16x128xf32, #tpu.memory_space<vmem>>, %arg7: memref<16x128xf32, #tpu.memory_space<vmem>>) attributes {dimension_semantics = [#tpu.dimension_semantics<parallel>], iteration_bounds = array<i64: 1>, scalar_prefetch = 0 : i64, scratch_operands = 1 : i64, tpu.core_type = #tpu.core_type<tc>, window_params = [{transform_indices = @transform_0, window_bounds = array<i64: 16, 128>}, {pipeline_mode = #tpu.pipeline_mode<synchronous>, transform_indices = @transform_1, window_bounds = array<i64: 128, 128>}, {pipeline_mode = #tpu.pipeline_mode<synchronous>, transform_indices = @transform_2, window_bounds = array<i64: 1, 128>}, {pipeline_mode = #tpu.pipeline_mode<synchronous>, transform_indices = @transform_3, window_bounds = array<i64: 128, 128>}, {pipeline_mode = #tpu.pipeline_mode<synchronous>, transform_indices = @transform_4, window_bounds = array<i64: 1, 128>}, {transform_indices = @transform_5, window_bounds = array<i64: 16, 128>}]} {
    %c0 = arith.constant 0 : index
    %c0_0 = arith.constant 0 : index
    %0 = vector.load %arg1[%c0, %c0_0] : memref<16x128xf32, #tpu.memory_space<vmem>>, vector<16x128xf32>
    %c0_1 = arith.constant 0 : index
    %c0_2 = arith.constant 0 : index
    %1 = vector.load %arg2[%c0_1, %c0_2] : memref<128x128xf32, #tpu.memory_space<vmem>>, vector<128x128xf32>
    %cst = arith.constant dense<0.000000e+00> : vector<16x128xf32>
    %2 = tpu.matmul %0, %1, %cst {dimension_numbers = #tpu.dot_dimension_numbers<[1], [0], [0], [1], [0, 0, 1, 1], [], []>} : vector<16x128xf32>, vector<128x128xf32>, vector<16x128xf32> -> vector<16x128xf32>
    %c0_3 = arith.constant 0 : index
    %c0_4 = arith.constant 0 : index
    %3 = vector.load %arg3[%c0_3, %c0_4] : memref<1x128xf32, #tpu.memory_space<vmem>>, vector<1x128xf32>
    %4 = vector.broadcast %3 : vector<1x128xf32> to vector<16x128xf32>
    %5 = arith.addf %2, %4 : vector<16x128xf32>
    %cst_5 = arith.constant 0.000000e+00 : f32
    %6 = vector.broadcast %cst_5 : f32 to vector<16x128xf32>
    %7 = arith.maximumf %5, %6 : vector<16x128xf32>
    %c0_6 = arith.constant 0 : index
    %c0_7 = arith.constant 0 : index
    %8 = vector.load %arg4[%c0_6, %c0_7] : memref<128x128xf32, #tpu.memory_space<vmem>>, vector<128x128xf32>
    %cst_8 = arith.constant dense<0.000000e+00> : vector<16x128xf32>
    %9 = tpu.matmul %7, %8, %cst_8 {dimension_numbers = #tpu.dot_dimension_numbers<[1], [0], [0], [1], [0, 0, 1, 1], [], []>} : vector<16x128xf32>, vector<128x128xf32>, vector<16x128xf32> -> vector<16x128xf32>
    %c0_9 = arith.constant 0 : index
    %c0_10 = arith.constant 0 : index
    %10 = vector.load %arg7[%c0_9, %c0_10] : memref<16x128xf32, #tpu.memory_space<vmem>>, vector<16x128xf32>
    tpu.vector_store %arg7[%c0_9, %c0_10], %9 {strides = array<i32>} : memref<16x128xf32, #tpu.memory_space<vmem>>, vector<16x128xf32>,
    %c0_11 = arith.constant 0 : index
    %c0_12 = arith.constant 0 : index
    %11 = vector.load %arg7[%c0_11, %c0_12] : memref<16x128xf32, #tpu.memory_space<vmem>>, vector<16x128xf32>
    %c0_13 = arith.constant 0 : index
    %c0_14 = arith.constant 0 : index
    %12 = vector.load %arg5[%c0_13, %c0_14] : memref<1x128xf32, #tpu.memory_space<vmem>>, vector<1x128xf32>
    %13 = vector.broadcast %12 : vector<1x128xf32> to vector<16x128xf32>
    %14 = arith.addf %11, %13 : vector<16x128xf32>
    %c0_15 = arith.constant 0 : index
    %c0_16 = arith.constant 0 : index
    %15 = vector.load %arg6[%c0_15, %c0_16] : memref<16x128xf32, #tpu.memory_space<vmem>>, vector<16x128xf32>
    tpu.vector_store %arg6[%c0_15, %c0_16], %14 {strides = array<i32>} : memref<16x128xf32, #tpu.memory_space<vmem>>, vector<16x128xf32>,
    return
  }
  func.func @transform_0(%arg0: i32) -> (i32, i32) {
    %c0_i32 = arith.constant 0 : i32
    %c0_i32_0 = arith.constant 0 : i32
    return %arg0, %c0_i32 : i32, i32
  }
  func.func @transform_1(%arg0: i32) -> (i32, i32) {
    %c0_i32 = arith.constant 0 : i32
    %c0_i32_0 = arith.constant 0 : i32
    %c0_i32_1 = arith.constant 0 : i32
    return %c0_i32, %c0_i32_0 : i32, i32
  }
  func.func @transform_2(%arg0: i32) -> (i32, i32) {
    %c0_i32 = arith.constant 0 : i32
    %c0_i32_0 = arith.constant 0 : i32
    %c0_i32_1 = arith.constant 0 : i32
    return %c0_i32, %c0_i32_0 : i32, i32
  }
  func.func @transform_3(%arg0: i32) -> (i32, i32) {
    %c0_i32 = arith.constant 0 : i32
    %c0_i32_0 = arith.constant 0 : i32
    %c0_i32_1 = arith.constant 0 : i32
    return %c0_i32, %c0_i32_0 : i32, i32
  }
  func.func @transform_4(%arg0: i32) -> (i32, i32) {
    %c0_i32 = arith.constant 0 : i32
    %c0_i32_0 = arith.constant 0 : i32
    %c0_i32_1 = arith.constant 0 : i32
    return %c0_i32, %c0_i32_0 : i32, i32
  }
  func.func @transform_5(%arg0: i32) -> (i32, i32) {
    %c0_i32 = arith.constant 0 : i32
    %c0_i32_0 = arith.constant 0 : i32
    return %arg0, %c0_i32 : i32, i32
  }
}

module attributes {stable_mosaic.version = 11 : i64} {
  func.func @ffn_kernel(%arg0: i32, %arg1: memref<16x128xf32, #tpu.memory_space<vmem>>, %arg2: memref<128x128xf32, #tpu.memory_space<vmem>>, %arg3: memref<1x128xf32, #tpu.memory_space<vmem>>, %arg4: memref<128x128xf32, #tpu.memory_space<vmem>>, %arg5: memref<1x128xf32, #tpu.memory_space<vmem>>, %arg6: memref<16x128xf32, #tpu.memory_space<vmem>>, %arg7: memref<16x128xf32, #tpu.memory_space<vmem>>) attributes {dimension_semantics = [#tpu.dimension_semantics<parallel>], iteration_bounds = array<i64: 1>, scalar_prefetch = 0 : i64, scratch_operands = 1 : i64, tpu.core_type = #tpu.core_type<tc>, window_params = [{transform_indices = @transform_0, window_bounds = array<i64: 16, 128>}, {pipeline_mode = #tpu.pipeline_mode<synchronous>, transform_indices = @transform_1, window_bounds = array<i64: 128, 128>}, {pipeline_mode = #tpu.pipeline_mode<synchronous>, transform_indices = @transform_2, window_bounds = array<i64: 1, 128>}, {pipeline_mode = #tpu.pipeline_mode<synchronous>, transform_indices = @transform_3, window_bounds = array<i64: 128, 128>}, {pipeline_mode = #tpu.pipeline_mode<synchronous>, transform_indices = @transform_4, window_bounds = array<i64: 1, 128>}, {transform_indices = @transform_5, window_bounds = array<i64: 16, 128>}]} {
    %c0 = arith.constant 0 : index
    %c0_0 = arith.constant 0 : index
    %0 = vector.load %arg1[%c0, %c0_0] : memref<16x128xf32, #tpu.memory_space<vmem>>, vector<16x128xf32>
    %c0_1 = arith.constant 0 : index
    %c0_2 = arith.constant 0 : index
    %1 = vector.load %arg2[%c0_1, %c0_2] : memref<128x128xf32, #tpu.memory_space<vmem>>, vector<128x128xf32>
    %cst = arith.constant dense<0.000000e+00> : vector<16x128xf32>
    %2 = tpu.matmul %0, %1, %cst {dimension_numbers = #tpu.dot_dimension_numbers<[1], [0], [0], [1], [0, 0, 1, 1], [], []>} : vector<16x128xf32>, vector<128x128xf32>, vector<16x128xf32> -> vector<16x128xf32>
    %c0_3 = arith.constant 0 : index
    %c0_4 = arith.constant 0 : index
    %3 = vector.load %arg3[%c0_3, %c0_4] : memref<1x128xf32, #tpu.memory_space<vmem>>, vector<1x128xf32>
    %4 = vector.broadcast %3 : vector<1x128xf32> to vector<16x128xf32>
    %5 = arith.addf %2, %4 : vector<16x128xf32>
    %cst_5 = arith.constant 0.000000e+00 : f32
    %6 = vector.broadcast %cst_5 : f32 to vector<16x128xf32>
    %7 = arith.maximumf %5, %6 : vector<16x128xf32>
    %c0_6 = arith.constant 0 : index
    %c0_7 = arith.constant 0 : index
    %8 = vector.load %arg4[%c0_6, %c0_7] : memref<128x128xf32, #tpu.memory_space<vmem>>, vector<128x128xf32>
    %cst_8 = arith.constant dense<0.000000e+00> : vector<16x128xf32>
    %9 = tpu.matmul %7, %8, %cst_8 {dimension_numbers = #tpu.dot_dimension_numbers<[1], [0], [0], [1], [0, 0, 1, 1], [], []>} : vector<16x128xf32>, vector<128x128xf32>, vector<16x128xf32> -> vector<16x128xf32>
    %c0_9 = arith.constant 0 : index
    %c0_10 = arith.constant 0 : index
    %10 = vector.load %arg7[%c0_9, %c0_10] : memref<16x128xf32, #tpu.memory_space<vmem>>, vector<16x128xf32>
    tpu.vector_store %arg7[%c0_9, %c0_10], %9 {strides = array<i32>} : memref<16x128xf32, #tpu.memory_space<vmem>>, vector<16x128xf32>,
    %c0_11 = arith.constant 0 : index
    %c0_12 = arith.constant 0 : index
    %11 = vector.load %arg7[%c0_11, %c0_12] : memref<16x128xf32, #tpu.memory_space<vmem>>, vector<16x128xf32>
    %c0_13 = arith.constant 0 : index
    %c0_14 = arith.constant 0 : index
    %12 = vector.load %arg5[%c0_13, %c0_14] : memref<1x128xf32, #tpu.memory_space<vmem>>, vector<1x128xf32>
    %13 = vector.broadcast %12 : vector<1x128xf32> to vector<16x128xf32>
    %14 = arith.addf %11, %13 : vector<16x128xf32>
    %c0_15 = arith.constant 0 : index
    %c0_16 = arith.constant 0 : index
    %15 = vector.load %arg6[%c0_15, %c0_16] : memref<16x128xf32, #tpu.memory_space<vmem>>, vector<16x128xf32>
    tpu.vector_store %arg6[%c0_15, %c0_16], %14 {strides = array<i32>} : memref<16x128xf32, #tpu.memory_space<vmem>>, vector<16x128xf32>,
    return
  }
  func.func @transform_0(%arg0: i32) -> (i32, i32) {
    %c0_i32 = arith.constant 0 : i32
    %c0_i32_0 = arith.constant 0 : i32
    return %arg0, %c0_i32 : i32, i32
  }
  func.func @transform_1(%arg0: i32) -> (i32, i32) {
    %c0_i32 = arith.constant 0 : i32
    %c0_i32_0 = arith.constant 0 : i32
    %c0_i32_1 = arith.constant 0 : i32
    return %c0_i32, %c0_i32_0 : i32, i32
  }
  func.func @transform_2(%arg0: i32) -> (i32, i32) {
    %c0_i32 = arith.constant 0 : i32
    %c0_i32_0 = arith.constant 0 : i32
    %c0_i32_1 = arith.constant 0 : i32
    return %c0_i32, %c0_i32_0 : i32, i32
  }
  func.func @transform_3(%arg0: i32) -> (i32, i32) {
    %c0_i32 = arith.constant 0 : i32
    %c0_i32_0 = arith.constant 0 : i32
    %c0_i32_1 = arith.constant 0 : i32
    return %c0_i32, %c0_i32_0 : i32, i32
  }
  func.func @transform_4(%arg0: i32) -> (i32, i32) {
    %c0_i32 = arith.constant 0 : i32
    %c0_i32_0 = arith.constant 0 : i32
    %c0_i32_1 = arith.constant 0 : i32
    return %c0_i32, %c0_i32_0 : i32, i32
  }
  func.func @transform_5(%arg0: i32) -> (i32, i32) {
    %c0_i32 = arith.constant 0 : i32
    %c0_i32_0 = arith.constant 0 : i32
    return %arg0, %c0_i32 : i32, i32
  }
}

</mosaic_0001>

<llo_original>
// kernel: tpu_custom_call.1
$region0: #{tpu_custom_call.1}
  #allocation0 [shape = 'u32[]', space=smem, size = 0x4, offset = 0x4, fixed_abs, tag = 'smem constant byte address 0x4 - core index']
  #allocation1 [shape = 'u32[72,128]{1,0:T(1,128)}', space=vmem, size = 0x9000, scoped, tag = 'internal scratch']
  #allocation2 [shape = 'f32[16,128]{1,0:T(8,128)}', space=vmem, size = 0x2000, scoped, tag = 'scratch operand']
  %s0 = inlined_call_operand.hbm [shape: f32[16,128], index: 0, kind: input, shape index: {}]
  %s1 = inlined_call_operand.hbm [shape: f32[128,128], index: 1, kind: input, shape index: {}]
  %s2 = inlined_call_operand.vmem [shape: f32[1,128], index: 2, kind: input, shape index: {}]
  %s3 = inlined_call_operand.hbm [shape: f32[128,128], index: 3, kind: input, shape index: {}]
  %s4 = inlined_call_operand.vmem [shape: f32[1,128], index: 4, kind: input, shape index: {}]
  %s5 = inlined_call_operand.hbm [shape: f32[16,128], index: 5, kind: output, shape index: {}]
  %s6 = sld [smem:[#allocation0]]
  $region42: #{tpu_custom_call.1} parent=0
    _
  %s8 = ssub.s32 1, %s6
  %s9 = scalar_select 0, %s8, %s6
  $region1: #{tpu_custom_call.1} parent=0
    #allocation3 [shape = 'u8[8192]{0}', space=vmem, size = 0x2000, scoped, tag = 'input window, operand 0, single buffered']
    #allocation4 [shape = 's32[1]{0}', space=sflag, size = 0x4, scoped, tag = 'scoped memory for tpu_custom_call.1']
    #allocation5 [shape = 's32[1]{0}', space=sflag, size = 0x4, scoped, tag = 'scoped memory for tpu_custom_call.1']
    #allocation6 [shape = 'u8[65536]{0}', space=vmem, size = 0x10000, scoped, tag = 'input window, operand 1, single buffered']
    #allocation7 [shape = 's32[1]{0}', space=sflag, size = 0x4, scoped, tag = 'scoped memory for tpu_custom_call.1']
    #allocation8 [shape = 'u8[65536]{0}', space=vmem, size = 0x10000, scoped, tag = 'input window, operand 3, single buffered']
    #allocation9 [shape = 'u8[8192]{0}', space=vmem, size = 0x2000, scoped, tag = 'output window, operand 0, single buffered']
    %10 = vsyncpa [#allocation4], 0
    %11 = vsyncpa [#allocation7], 0
    %12 = vsyncpa [#allocation5], 0
    // Predicated region
    $region2: #{tpu_custom_call.1} parent=1 // pred_check
      _
    $region3: #{tpu_custom_call.1} parent=1 // pred_check_branch
      %14 = sbr.rel (0) target = $region5
    $region4: #{tpu_custom_call.1} parent=1 // pred_region
      %16 = vsyncadd [#allocation4], 0
      %s17 = sshll.u32 %s0, 4
      %s18 = int_to_ptr.hbm [resolvable:$true] %s17
      %s19 = sshll.u32 [#allocation3], 4
      %s20 = int_to_ptr.vmem [resolvable:$true] %s19
      %25 = dma.hbm_to_vmem [thread:$0]  %s18, 256, %s20, [#allocation4], 128, 128, 8
    $region5: #{tpu_custom_call.1} parent=1 // pred_fallthru
      _
    // Predicated region
    $region6: #{tpu_custom_call.1} parent=1 // pred_check
      _
    $region7: #{tpu_custom_call.1} parent=1 // pred_check_branch
      %27 = sbr.rel (0) target = $region9
    $region8: #{tpu_custom_call.1} parent=1 // pred_region
      %29 = vsyncadd [#allocation7], 0
      %s30 = sshll.u32 %s1, 4
      %s31 = int_to_ptr.hbm [resolvable:$true] %s30
      %s32 = sshll.u32 [#allocation6], 4
      %s33 = int_to_ptr.vmem [resolvable:$true] %s32
      %38 = dma.hbm_to_vmem [thread:$0]  %s31, 2048, %s33, [#allocation7], 128, 128, 8
    $region9: #{tpu_custom_call.1} parent=1 // pred_fallthru
      _
    // Predicated region
    $region10: #{tpu_custom_call.1} parent=1 // pred_check
      _
    $region11: #{tpu_custom_call.1} parent=1 // pred_check_branch
      %40 = sbr.rel (0) target = $region13
    $region12: #{tpu_custom_call.1} parent=1 // pred_region
      _
    $region13: #{tpu_custom_call.1} parent=1 // pred_fallthru
      _
    // Predicated region
    $region14: #{tpu_custom_call.1} parent=1 // pred_check
      _
    $region15: #{tpu_custom_call.1} parent=1 // pred_check_branch
      %42 = sbr.rel (0) target = $region17
    $region16: #{tpu_custom_call.1} parent=1 // pred_region
      %44 = vsyncadd [#allocation7], 0
      %s45 = sshll.u32 %s3, 4
      %s46 = int_to_ptr.hbm [resolvable:$true] %s45
      %s47 = sshll.u32 [#allocation8], 4
      %s48 = int_to_ptr.vmem [resolvable:$true] %s47
      %53 = dma.hbm_to_vmem [thread:$0]  %s46, 2048, %s48, [#allocation7], 128, 128, 8
    $region17: #{tpu_custom_call.1} parent=1 // pred_fallthru
      _
    // Predicated region
    $region18: #{tpu_custom_call.1} parent=1 // pred_check
      _
    $region19: #{tpu_custom_call.1} parent=1 // pred_check_branch
      %55 = sbr.rel (0) target = $region21
    $region20: #{tpu_custom_call.1} parent=1 // pred_region
      _
    $region21: #{tpu_custom_call.1} parent=1 // pred_fallthru
      _
    // Predicated region
    $region22: #{tpu_custom_call.1} parent=1 // pred_check
      _
    $region23: #{tpu_custom_call.1} parent=1 // pred_check_branch
      %57 = sbr.rel (0) target = $region25
    $region24: #{tpu_custom_call.1} parent=1 // pred_region
      %59 = dma.done [#allocation4], 256
    $region25: #{tpu_custom_call.1} parent=1 // pred_fallthru
      _
    // Predicated region
    $region26: #{tpu_custom_call.1} parent=1 // pred_check
      _
    $region27: #{tpu_custom_call.1} parent=1 // pred_check_branch
      %61 = sbr.rel (0) target = $region29
    $region28: #{tpu_custom_call.1} parent=1 // pred_region
      %63 = dma.done [#allocation7], 2048
    $region29: #{tpu_custom_call.1} parent=1 // pred_fallthru
      _
    // Predicated region
    $region30: #{tpu_custom_call.1} parent=1 // pred_check
      _
    $region31: #{tpu_custom_call.1} parent=1 // pred_check_branch
      %65 = sbr.rel (0) target = $region33
    $region32: #{tpu_custom_call.1} parent=1 // pred_region
      %67 = dma.done [#allocation7], 2048
    $region33: #{tpu_custom_call.1} parent=1 // pred_fallthru
      _
    %v68 = vld [vmem:[#allocation3] sm:$0xff]
    %v69 = vld [vmem:[#allocation3 + $0x8] sm:$0xff]
    %v70 = vld [vmem:[#allocation6] sm:$0xff]
    %v71 = vld [vmem:[#allocation6 + $0x8] sm:$0xff]
    %v72 = vld [vmem:[#allocation6 + $0x10] sm:$0xff]
    %v73 = vld [vmem:[#allocation6 + $0x18] sm:$0xff]
    %v74 = vld [vmem:[#allocation6 + $0x20] sm:$0xff]
    %v75 = vld [vmem:[#allocation6 + $0x28] sm:$0xff]
    %v76 = vld [vmem:[#allocation6 + $0x30] sm:$0xff]
    %v77 = vld [vmem:[#allocation6 + $0x38] sm:$0xff]
    %v78 = vld [vmem:[#allocation6 + $0x40] sm:$0xff]
    %v79 = vld [vmem:[#allocation6 + $0x48] sm:$0xff]
    %v80 = vld [vmem:[#allocation6 + $0x50] sm:$0xff]
    %v81 = vld [vmem:[#allocation6 + $0x58] sm:$0xff]
    %v82 = vld [vmem:[#allocation6 + $0x60] sm:$0xff]
    %v83 = vld [vmem:[#allocation6 + $0x68] sm:$0xff]
    %v84 = vld [vmem:[#allocation6 + $0x70] sm:$0xff]
    %v85 = vld [vmem:[#allocation6 + $0x78] sm:$0xff]
    %v86 = vld [vmem:[%s2] sm:$0x1]
    %v88 = vperm.slane %v86, 0
    %90 = vmatpush.msra.mxu0 %v85
    %91 = vmatpush.msra.mxu0 %v84
    %92 = vmatpush.msra.mxu0 %v83
    %93 = vmatpush.msra.mxu0 %v82
    %94 = vmatpush.msra.mxu0 %v81
    %95 = vmatpush.msra.mxu0 %v80
    %96 = vmatpush.msra.mxu0 %v79
    %97 = vmatpush.msra.mxu0 %v78
    %98 = vmatpush.msra.mxu0 %v77
    %99 = vmatpush.msra.mxu0 %v76
    %100 = vmatpush.msra.mxu0 %v75
    %101 = vmatpush.msra.mxu0 %v74
    %102 = vmatpush.msra.mxu0 %v73
    %103 = vmatpush.msra.mxu0 %v72
    %104 = vmatpush.msra.mxu0 %v71
    %105 = vmatpush.msra.mxu0 %v70
    %106 = vmatmul.f32.gmra.mxu0 %v68
    %v107 = vpop.f32.mrf.mxu0
    %v108 = vadd.f32 %v88, %v107
    %109 = vmatmul.f32.gmra.mxu0 %v69
    %v110 = vpop.f32.mrf.mxu0
    %v111 = vadd.f32 %v88, %v110
    %112 = vdwg.mxu0
    %v113 = vmax.f32 %v108, 0.0
    %v114 = vmax.f32 %v111, 0.0
    %v115 = vld [vmem:[#allocation8] sm:$0xff]
    %v116 = vld [vmem:[#allocation8 + $0x8] sm:$0xff]
    %v117 = vld [vmem:[#allocation8 + $0x10] sm:$0xff]
    %v118 = vld [vmem:[#allocation8 + $0x18] sm:$0xff]
    %v119 = vld [vmem:[#allocation8 + $0x20] sm:$0xff]
    %v120 = vld [vmem:[#allocation8 + $0x28] sm:$0xff]
    %v121 = vld [vmem:[#allocation8 + $0x30] sm:$0xff]
    %v122 = vld [vmem:[#allocation8 + $0x38] sm:$0xff]
    %v123 = vld [vmem:[#allocation8 + $0x40] sm:$0xff]
    %v124 = vld [vmem:[#allocation8 + $0x48] sm:$0xff]
    %v125 = vld [vmem:[#allocation8 + $0x50] sm:$0xff]
    %v126 = vld [vmem:[#allocation8 + $0x58] sm:$0xff]
    %v127 = vld [vmem:[#allocation8 + $0x60] sm:$0xff]
    %v128 = vld [vmem:[#allocation8 + $0x68] sm:$0xff]
    %v129 = vld [vmem:[#allocation8 + $0x70] sm:$0xff]
    %v130 = vld [vmem:[#allocation8 + $0x78] sm:$0xff]
    %131 = vmatpush.msra.mxu0 %v130
    %132 = vmatpush.msra.mxu0 %v129
    %133 = vmatpush.msra.mxu0 %v128
    %134 = vmatpush.msra.mxu0 %v127
    %135 = vmatpush.msra.mxu0 %v126
    %136 = vmatpush.msra.mxu0 %v125
    %137 = vmatpush.msra.mxu0 %v124
    %138 = vmatpush.msra.mxu0 %v123
    %139 = vmatpush.msra.mxu0 %v122
    %140 = vmatpush.msra.mxu0 %v121
    %141 = vmatpush.msra.mxu0 %v120
    %142 = vmatpush.msra.mxu0 %v119
    %143 = vmatpush.msra.mxu0 %v118
    %144 = vmatpush.msra.mxu0 %v117
    %145 = vmatpush.msra.mxu0 %v116
    %146 = vmatpush.msra.mxu0 %v115
    %147 = vmatmul.f32.gmra.mxu0 %v113
    %v148 = vpop.f32.mrf.mxu0
    %v149 = vadd.f32 0.0, %v148
    %150 = vmatmul.f32.gmra.mxu0 %v114
    %v151 = vpop.f32.mrf.mxu0
    %v152 = vadd.f32 0.0, %v151
    %153 = vdwg.mxu0
    %154 = vst [vmem:[#allocation2] sm:$0xff] %v149
    %155 = vst [vmem:[#allocation2 + $0x8] sm:$0xff] %v152
    %v156 = vld [vmem:[#allocation2] sm:$0xff]
    %v157 = vld [vmem:[#allocation2 + $0x8] sm:$0xff]
    %v158 = vld [vmem:[%s4] sm:$0x1]
    %v160 = vperm.slane %v158, 0
    %v162 = vadd.f32 %v156, %v160
    %v163 = vadd.f32 %v157, %v160
    %164 = vst [vmem:[#allocation9] sm:$0xff] %v162
    %165 = vst [vmem:[#allocation9 + $0x8] sm:$0xff] %v163
    // Predicated region
    $region34: #{tpu_custom_call.1} parent=1 // pred_check
      _
    $region35: #{tpu_custom_call.1} parent=1 // pred_check_branch
      %167 = sbr.rel (0) target = $region37
    $region36: #{tpu_custom_call.1} parent=1 // pred_region
      %169 = vsyncadd [#allocation5], 0
      %s170 = sshll.u32 [#allocation9], 4
      %s171 = int_to_ptr.vmem [resolvable:$true] %s170
      %s172 = sshll.u32 %s5, 4
      %s173 = int_to_ptr.hbm [resolvable:$true] %s172
      %178 = dma.vmem_to_hbm [thread:$0]  %s171, 256, %s173, [#allocation5], 128, 128, 8
    $region37: #{tpu_custom_call.1} parent=1 // pred_fallthru
      _
    // Predicated region
    $region38: #{tpu_custom_call.1} parent=1 // pred_check
      _
    $region39: #{tpu_custom_call.1} parent=1 // pred_check_branch
      %180 = sbr.rel (0) target = $region41
    $region40: #{tpu_custom_call.1} parent=1 // pred_region
      %182 = dma.done [#allocation5], 256
    $region41: #{tpu_custom_call.1} parent=1 // pred_fallthru
      _
    %183 = vsyncpa [#allocation4], 1
    %184 = vsyncpa [#allocation7], 1
    %185 = vsyncpa [#allocation5], 1

// kernel: tpu_custom_call.1
$region0: #{tpu_custom_call.1}
  #allocation0 [shape = 'u32[]', space=smem, size = 0x4, offset = 0x4, fixed_abs, tag = 'smem constant byte address 0x4 - core index']
  #allocation1 [shape = 'u32[72,128]{1,0:T(1,128)}', space=vmem, size = 0x9000, scoped, tag = 'internal scratch']
  #allocation2 [shape = 'f32[16,128]{1,0:T(8,128)}', space=vmem, size = 0x2000, scoped, tag = 'scratch operand']
  %s0 = inlined_call_operand.hbm [shape: f32[16,128], index: 0, kind: input, shape index: {}]
  %s1 = inlined_call_operand.hbm [shape: f32[128,128], index: 1, kind: input, shape index: {}]
  %s2 = inlined_call_operand.vmem [shape: f32[1,128], index: 2, kind: input, shape index: {}]
  %s3 = inlined_call_operand.hbm [shape: f32[128,128], index: 3, kind: input, shape index: {}]
  %s4 = inlined_call_operand.vmem [shape: f32[1,128], index: 4, kind: input, shape index: {}]
  %s5 = inlined_call_operand.hbm [shape: f32[16,128], index: 5, kind: output, shape index: {}]
  %s6 = sld [smem:[#allocation0]]
  $region42: #{tpu_custom_call.1} parent=0
    _
  %s8 = ssub.s32 1, %s6
  %s9 = scalar_select 0, %s8, %s6
  $region1: #{tpu_custom_call.1} parent=0
    #allocation3 [shape = 'u8[8192]{0}', space=vmem, size = 0x2000, scoped, tag = 'input window, operand 0, single buffered']
    #allocation4 [shape = 's32[1]{0}', space=sflag, size = 0x4, scoped, tag = 'scoped memory for tpu_custom_call.1']
    #allocation5 [shape = 's32[1]{0}', space=sflag, size = 0x4, scoped, tag = 'scoped memory for tpu_custom_call.1']
    #allocation6 [shape = 'u8[65536]{0}', space=vmem, size = 0x10000, scoped, tag = 'input window, operand 1, single buffered']
    #allocation7 [shape = 's32[1]{0}', space=sflag, size = 0x4, scoped, tag = 'scoped memory for tpu_custom_call.1']
    #allocation8 [shape = 'u8[65536]{0}', space=vmem, size = 0x10000, scoped, tag = 'input window, operand 3, single buffered']
    #allocation9 [shape = 'u8[8192]{0}', space=vmem, size = 0x2000, scoped, tag = 'output window, operand 0, single buffered']
    %10 = vsyncpa [#allocation4], 0
    %11 = vsyncpa [#allocation7], 0
    %12 = vsyncpa [#allocation5], 0
    // Predicated region
    $region2: #{tpu_custom_call.1} parent=1 // pred_check
      _
    $region3: #{tpu_custom_call.1} parent=1 // pred_check_branch
      %14 = sbr.rel (0) target = $region5
    $region4: #{tpu_custom_call.1} parent=1 // pred_region
      %16 = vsyncadd [#allocation4], 0
      %s17 = sshll.u32 %s0, 4
      %s18 = int_to_ptr.hbm [resolvable:$true] %s17
      %s19 = sshll.u32 [#allocation3], 4
      %s20 = int_to_ptr.vmem [resolvable:$true] %s19
      %25 = dma.hbm_to_vmem [thread:$0]  %s18, 256, %s20, [#allocation4], 128, 128, 8
    $region5: #{tpu_custom_call.1} parent=1 // pred_fallthru
      _
    // Predicated region
    $region6: #{tpu_custom_call.1} parent=1 // pred_check
      _
    $region7: #{tpu_custom_call.1} parent=1 // pred_check_branch
      %27 = sbr.rel (0) target = $region9
    $region8: #{tpu_custom_call.1} parent=1 // pred_region
      %29 = vsyncadd [#allocation7], 0
      %s30 = sshll.u32 %s1, 4
      %s31 = int_to_ptr.hbm [resolvable:$true] %s30
      %s32 = sshll.u32 [#allocation6], 4
      %s33 = int_to_ptr.vmem [resolvable:$true] %s32
      %38 = dma.hbm_to_vmem [thread:$0]  %s31, 2048, %s33, [#allocation7], 128, 128, 8
    $region9: #{tpu_custom_call.1} parent=1 // pred_fallthru
      _
    // Predicated region
    $region10: #{tpu_custom_call.1} parent=1 // pred_check
      _
    $region11: #{tpu_custom_call.1} parent=1 // pred_check_branch
      %40 = sbr.rel (0) target = $region13
    $region12: #{tpu_custom_call.1} parent=1 // pred_region
      _
    $region13: #{tpu_custom_call.1} parent=1 // pred_fallthru
      _
    // Predicated region
    $region14: #{tpu_custom_call.1} parent=1 // pred_check
      _
    $region15: #{tpu_custom_call.1} parent=1 // pred_check_branch
      %42 = sbr.rel (0) target = $region17
    $region16: #{tpu_custom_call.1} parent=1 // pred_region
      %44 = vsyncadd [#allocation7], 0
      %s45 = sshll.u32 %s3, 4
      %s46 = int_to_ptr.hbm [resolvable:$true] %s45
      %s47 = sshll.u32 [#allocation8], 4
      %s48 = int_to_ptr.vmem [resolvable:$true] %s47
      %53 = dma.hbm_to_vmem [thread:$0]  %s46, 2048, %s48, [#allocation7], 128, 128, 8
    $region17: #{tpu_custom_call.1} parent=1 // pred_fallthru
      _
    // Predicated region
    $region18: #{tpu_custom_call.1} parent=1 // pred_check
      _
    $region19: #{tpu_custom_call.1} parent=1 // pred_check_branch
      %55 = sbr.rel (0) target = $region21
    $region20: #{tpu_custom_call.1} parent=1 // pred_region
      _
    $region21: #{tpu_custom_call.1} parent=1 // pred_fallthru
      _
    // Predicated region
    $region22: #{tpu_custom_call.1} parent=1 // pred_check
      _
    $region23: #{tpu_custom_call.1} parent=1 // pred_check_branch
      %57 = sbr.rel (0) target = $region25
    $region24: #{tpu_custom_call.1} parent=1 // pred_region
      %59 = dma.done [#allocation4], 256
    $region25: #{tpu_custom_call.1} parent=1 // pred_fallthru
      _
    // Predicated region
    $region26: #{tpu_custom_call.1} parent=1 // pred_check
      _
    $region27: #{tpu_custom_call.1} parent=1 // pred_check_branch
      %61 = sbr.rel (0) target = $region29
    $region28: #{tpu_custom_call.1} parent=1 // pred_region
      %63 = dma.done [#allocation7], 2048
    $region29: #{tpu_custom_call.1} parent=1 // pred_fallthru
      _
    // Predicated region
    $region30: #{tpu_custom_call.1} parent=1 // pred_check
      _
    $region31: #{tpu_custom_call.1} parent=1 // pred_check_branch
      %65 = sbr.rel (0) target = $region33
    $region32: #{tpu_custom_call.1} parent=1 // pred_region
      %67 = dma.done [#allocation7], 2048
    $region33: #{tpu_custom_call.1} parent=1 // pred_fallthru
      _
    %v68 = vld [vmem:[#allocation3] sm:$0xff]
    %v69 = vld [vmem:[#allocation3 + $0x8] sm:$0xff]
    %v70 = vld [vmem:[#allocation6] sm:$0xff]
    %v71 = vld [vmem:[#allocation6 + $0x8] sm:$0xff]
    %v72 = vld [vmem:[#allocation6 + $0x10] sm:$0xff]
    %v73 = vld [vmem:[#allocation6 + $0x18] sm:$0xff]
    %v74 = vld [vmem:[#allocation6 + $0x20] sm:$0xff]
    %v75 = vld [vmem:[#allocation6 + $0x28] sm:$0xff]
    %v76 = vld [vmem:[#allocation6 + $0x30] sm:$0xff]
    %v77 = vld [vmem:[#allocation6 + $0x38] sm:$0xff]
    %v78 = vld [vmem:[#allocation6 + $0x40] sm:$0xff]
    %v79 = vld [vmem:[#allocation6 + $0x48] sm:$0xff]
    %v80 = vld [vmem:[#allocation6 + $0x50] sm:$0xff]
    %v81 = vld [vmem:[#allocation6 + $0x58] sm:$0xff]
    %v82 = vld [vmem:[#allocation6 + $0x60] sm:$0xff]
    %v83 = vld [vmem:[#allocation6 + $0x68] sm:$0xff]
    %v84 = vld [vmem:[#allocation6 + $0x70] sm:$0xff]
    %v85 = vld [vmem:[#allocation6 + $0x78] sm:$0xff]
    %v86 = vld [vmem:[%s2] sm:$0x1]
    %v88 = vperm.slane %v86, 0
    %90 = vmatpush.msra.mxu0 %v85
    %91 = vmatpush.msra.mxu0 %v84
    %92 = vmatpush.msra.mxu0 %v83
    %93 = vmatpush.msra.mxu0 %v82
    %94 = vmatpush.msra.mxu0 %v81
    %95 = vmatpush.msra.mxu0 %v80
    %96 = vmatpush.msra.mxu0 %v79
    %97 = vmatpush.msra.mxu0 %v78
    %98 = vmatpush.msra.mxu0 %v77
    %99 = vmatpush.msra.mxu0 %v76
    %100 = vmatpush.msra.mxu0 %v75
    %101 = vmatpush.msra.mxu0 %v74
    %102 = vmatpush.msra.mxu0 %v73
    %103 = vmatpush.msra.mxu0 %v72
    %104 = vmatpush.msra.mxu0 %v71
    %105 = vmatpush.msra.mxu0 %v70
    %106 = vmatmul.f32.gmra.mxu0 %v68
    %v107 = vpop.f32.mrf.mxu0
    %v108 = vadd.f32 %v88, %v107
    %109 = vmatmul.f32.gmra.mxu0 %v69
    %v110 = vpop.f32.mrf.mxu0
    %v111 = vadd.f32 %v88, %v110
    %112 = vdwg.mxu0
    %v113 = vmax.f32 %v108, 0.0
    %v114 = vmax.f32 %v111, 0.0
    %v115 = vld [vmem:[#allocation8] sm:$0xff]
    %v116 = vld [vmem:[#allocation8 + $0x8] sm:$0xff]
    %v117 = vld [vmem:[#allocation8 + $0x10] sm:$0xff]
    %v118 = vld [vmem:[#allocation8 + $0x18] sm:$0xff]
    %v119 = vld [vmem:[#allocation8 + $0x20] sm:$0xff]
    %v120 = vld [vmem:[#allocation8 + $0x28] sm:$0xff]
    %v121 = vld [vmem:[#allocation8 + $0x30] sm:$0xff]
    %v122 = vld [vmem:[#allocation8 + $0x38] sm:$0xff]
    %v123 = vld [vmem:[#allocation8 + $0x40] sm:$0xff]
    %v124 = vld [vmem:[#allocation8 + $0x48] sm:$0xff]
    %v125 = vld [vmem:[#allocation8 + $0x50] sm:$0xff]
    %v126 = vld [vmem:[#allocation8 + $0x58] sm:$0xff]
    %v127 = vld [vmem:[#allocation8 + $0x60] sm:$0xff]
    %v128 = vld [vmem:[#allocation8 + $0x68] sm:$0xff]
    %v129 = vld [vmem:[#allocation8 + $0x70] sm:$0xff]
    %v130 = vld [vmem:[#allocation8 + $0x78] sm:$0xff]
    %131 = vmatpush.msra.mxu0 %v130
    %132 = vmatpush.msra.mxu0 %v129
    %133 = vmatpush.msra.mxu0 %v128
    %134 = vmatpush.msra.mxu0 %v127
    %135 = vmatpush.msra.mxu0 %v126
    %136 = vmatpush.msra.mxu0 %v125
    %137 = vmatpush.msra.mxu0 %v124
    %138 = vmatpush.msra.mxu0 %v123
    %139 = vmatpush.msra.mxu0 %v122
    %140 = vmatpush.msra.mxu0 %v121
    %141 = vmatpush.msra.mxu0 %v120
    %142 = vmatpush.msra.mxu0 %v119
    %143 = vmatpush.msra.mxu0 %v118
    %144 = vmatpush.msra.mxu0 %v117
    %145 = vmatpush.msra.mxu0 %v116
    %146 = vmatpush.msra.mxu0 %v115
    %147 = vmatmul.f32.gmra.mxu0 %v113
    %v148 = vpop.f32.mrf.mxu0
    %v149 = vadd.f32 0.0, %v148
    %150 = vmatmul.f32.gmra.mxu0 %v114
    %v151 = vpop.f32.mrf.mxu0
    %v152 = vadd.f32 0.0, %v151
    %153 = vdwg.mxu0
    %154 = vst [vmem:[#allocation2] sm:$0xff] %v149
    %155 = vst [vmem:[#allocation2 + $0x8] sm:$0xff] %v152
    %v156 = vld [vmem:[#allocation2] sm:$0xff]
    %v157 = vld [vmem:[#allocation2 + $0x8] sm:$0xff]
    %v158 = vld [vmem:[%s4] sm:$0x1]
    %v160 = vperm.slane %v158, 0
    %v162 = vadd.f32 %v156, %v160
    %v163 = vadd.f32 %v157, %v160
    %164 = vst [vmem:[#allocation9] sm:$0xff] %v162
    %165 = vst [vmem:[#allocation9 + $0x8] sm:$0xff] %v163
    // Predicated region
    $region34: #{tpu_custom_call.1} parent=1 // pred_check
      _
    $region35: #{tpu_custom_call.1} parent=1 // pred_check_branch
      %167 = sbr.rel (0) target = $region37
    $region36: #{tpu_custom_call.1} parent=1 // pred_region
      %169 = vsyncadd [#allocation5], 0
      %s170 = sshll.u32 [#allocation9], 4
      %s171 = int_to_ptr.vmem [resolvable:$true] %s170
      %s172 = sshll.u32 %s5, 4
      %s173 = int_to_ptr.hbm [resolvable:$true] %s172
      %178 = dma.vmem_to_hbm [thread:$0]  %s171, 256, %s173, [#allocation5], 128, 128, 8
    $region37: #{tpu_custom_call.1} parent=1 // pred_fallthru
      _
    // Predicated region
    $region38: #{tpu_custom_call.1} parent=1 // pred_check
      _
    $region39: #{tpu_custom_call.1} parent=1 // pred_check_branch
      %180 = sbr.rel (0) target = $region41
    $region40: #{tpu_custom_call.1} parent=1 // pred_region
      %182 = dma.done [#allocation5], 256
    $region41: #{tpu_custom_call.1} parent=1 // pred_fallthru
      _
    %183 = vsyncpa [#allocation4], 1
    %184 = vsyncpa [#allocation7], 1
    %185 = vsyncpa [#allocation5], 1

</llo_original>
